<compile_context>
chip_gen: v7x
topology: tpu7x:2x2x1
jax: 0.10.0
libtpu: 0.0.40
codegen_flags: <defaults>
</compile_context>

<pallas_src>
import jax
import jax.numpy as jnp
from jax.experimental import pallas as pl
from jax.experimental.pallas import tpu as pltpu


def _hswish_kernel(x_ref, o_ref):
    x = x_ref[...]
    # relu6(x + 3) = clamp(x + 3, 0, 6); multiply by 1/6 instead of dividing.
    r6 = jnp.clip(x + 3.0, 0.0, 6.0)
    o_ref[...] = (x * r6 * (1.0 / 6.0)).astype(o_ref.dtype)


def _sublane_pack(dtype) -> int:
    # Sub-32-bit dtypes pack along sublanes: 8 rows for 32-bit, 16 for 16-bit, 32 for 8-bit.
    itemsize = jnp.dtype(dtype).itemsize
    return max(8, 32 // itemsize)


def hswish(x: jax.Array, *, target_block_bytes: int = 2 * 1024 * 1024) -> jax.Array:
    """Applies h-swish elementwise. Accepts any shape; NCHW expected upstream."""
    orig_shape = x.shape
    dtype = x.dtype
    total = x.size
    itemsize = jnp.dtype(dtype).itemsize
    pack = _sublane_pack(dtype)

    # Wide lane-dense slab: 1024 columns (multiple of 128 -> unmasked vst).
    cols = 1024
    row_quantum = cols * pack  # keep rows a multiple of the sublane packing
    padded_total = ((total + row_quantum - 1) // row_quantum) * row_quantum

    flat = x.reshape(-1)
    if padded_total != total:
        flat = jnp.pad(flat, (0, padded_total - total))
    rows = padded_total // cols
    x2d = flat.reshape(rows, cols)

    # ~2 MiB blocks (f32: 512 x 1024; bf16: 1024 x 1024). Big enough to amortize
    # the ~0.35 us/step grid overhead, small enough that 2 input + 2 output
    # double-buffers (~8 MiB) fit every generation's scoped-VMEM default.
    tr = max(pack, (target_block_bytes // (cols * itemsize)) // pack * pack)
    tr = min(tr, rows)

    grid = (pl.cdiv(rows, tr),)  # ragged last block handled by Pallas

    out2d = pl.pallas_call(
        _hswish_kernel,
        out_shape=jax.ShapeDtypeStruct((rows, cols), dtype),
        grid_spec=pltpu.PrefetchScalarGridSpec(
            num_scalar_prefetch=0,
            grid=grid,
            in_specs=[pl.BlockSpec((tr, cols), lambda i: (i, 0))],
            out_specs=pl.BlockSpec((tr, cols), lambda i: (i, 0)),
        ),
        compiler_params=pltpu.CompilerParams(
            # No-op on 1-TC chips; lets v7x shard the stream across its 2 TCs.
            dimension_semantics=("parallel",),
        ),
    )(x2d)

    out_flat = out2d.reshape(-1)
    if padded_total != total:
        out_flat = out_flat[:total]
    return out_flat.reshape(orig_shape)


def _hswish_ref(x):
    return x * jnp.clip(x + 3.0, 0.0, 6.0) / 6.0


if __name__ == "__main__":
    key = jax.random.PRNGKey(0)

    # NCHW input, small shapes: batch=2, channels=4, spatial=16x16
    x = jax.random.normal(key, (2, 4, 16, 16), dtype=jnp.float32) * 4.0
    y = jax.block_until_ready(hswish(x))
    y_ref = _hswish_ref(x)
    assert y.shape == x.shape and y.dtype == x.dtype
    assert jnp.allclose(y, y_ref, atol=1e-5, rtol=1e-5), "mismatch vs reference"

    # Exercise the padding path with an odd, non-128-divisible size.
    x_odd = jax.random.normal(jax.random.PRNGKey(1), (2, 3, 7, 5), dtype=jnp.float32) * 4.0
    y_odd = jax.block_until_ready(hswish(x_odd))
    assert y_odd.shape == x_odd.shape and y_odd.dtype == x_odd.dtype
    assert jnp.allclose(y_odd, _hswish_ref(x_odd), atol=1e-5, rtol=1e-5), "mismatch (odd size)"

    print("KERNEL_OK")
</pallas_src>

<mosaic_0001>
module attributes {stable_mosaic.version = 11 : i64} {
  func.func @_hswish_kernel(%arg0: i32, %arg1: memref<8x1024xf32, #tpu.memory_space<vmem>>, %arg2: memref<8x1024xf32, #tpu.memory_space<vmem>>) attributes {dimension_semantics = [#tpu.dimension_semantics<parallel>], iteration_bounds = array<i64: 1>, scalar_prefetch = 0 : i64, scratch_operands = 0 : i64, tpu.core_type = #tpu.core_type<tc>, window_params = [{transform_indices = @transform_0, window_bounds = array<i64: 8, 1024>}, {transform_indices = @transform_1, window_bounds = array<i64: 8, 1024>}]} {
    %c0 = arith.constant 0 : index
    %c0_0 = arith.constant 0 : index
    %0 = vector.load %arg1[%c0, %c0_0] : memref<8x1024xf32, #tpu.memory_space<vmem>>, vector<8x1024xf32>
    %cst = arith.constant 3.000000e+00 : f32
    %1 = vector.broadcast %cst : f32 to vector<8x1024xf32>
    %2 = arith.addf %0, %1 : vector<8x1024xf32>
    %cst_1 = arith.constant 0.000000e+00 : f32
    %cst_2 = arith.constant 6.000000e+00 : f32
    %3 = vector.broadcast %cst_1 : f32 to vector<8x1024xf32>
    %4 = arith.maximumf %3, %2 : vector<8x1024xf32>
    %5 = vector.broadcast %cst_2 : f32 to vector<8x1024xf32>
    %6 = arith.minimumf %5, %4 : vector<8x1024xf32>
    %7 = arith.mulf %0, %6 : vector<8x1024xf32>
    %cst_3 = arith.constant 0.166666672 : f32
    %8 = vector.broadcast %cst_3 : f32 to vector<8x1024xf32>
    %9 = arith.mulf %7, %8 : vector<8x1024xf32>
    %c0_4 = arith.constant 0 : index
    %c0_5 = arith.constant 0 : index
    %10 = vector.load %arg2[%c0_4, %c0_5] : memref<8x1024xf32, #tpu.memory_space<vmem>>, vector<8x1024xf32>
    tpu.vector_store %arg2[%c0_4, %c0_5], %9 {strides = array<i32>} : memref<8x1024xf32, #tpu.memory_space<vmem>>, vector<8x1024xf32>,
    return
  }
  func.func @transform_0(%arg0: i32) -> (i32, i32) {
    %c0_i32 = arith.constant 0 : i32
    %c0_i32_0 = arith.constant 0 : i32
    return %arg0, %c0_i32 : i32, i32
  }
  func.func @transform_1(%arg0: i32) -> (i32, i32) {
    %c0_i32 = arith.constant 0 : i32
    %c0_i32_0 = arith.constant 0 : i32
    return %arg0, %c0_i32 : i32, i32
  }
}

</mosaic_0001>

<llo_original>
// kernel: tpu_custom_call.1
$region0: #{tpu_custom_call.1}
  #allocation0 [shape = 'u32[]', space=smem, size = 0x4, offset = 0x4, fixed_abs, tag = 'smem constant byte address 0x4 - core index']
  #allocation1 [shape = 'u32[144,128]{1,0:T(1,128)}', space=vmem, size = 0x12000, scoped, tag = 'internal scratch']
  %s0 = inlined_call_operand.hbm [shape: f32[8,1024], index: 0, kind: input, shape index: {}]
  %s1 = inlined_call_operand.hbm [shape: f32[8,1024], index: 1, kind: output, shape index: {}]
  %s2 = sld [smem:[#allocation0]]
  $region18: #{tpu_custom_call.1} parent=0
    _
  %s4 = ssub.s32 1, %s2
  %s5 = scalar_select 0, %s4, %s2
  $region1: #{tpu_custom_call.1} parent=0
    #allocation2 [shape = 'u8[32768]{0}', space=vmem, size = 0x8000, scoped, tag = 'input window, operand 0, single buffered']
    #allocation3 [shape = 's32[1]{0}', space=sflag, size = 0x4, scoped, tag = 'scoped memory for tpu_custom_call.1']
    #allocation4 [shape = 's32[1]{0}', space=sflag, size = 0x4, scoped, tag = 'scoped memory for tpu_custom_call.1']
    #allocation5 [shape = 'u8[32768]{0}', space=vmem, size = 0x8000, scoped, tag = 'output window, operand 0, single buffered']
    %6 = vsyncpa [#allocation3], 0
    %7 = vsyncpa [#allocation4], 0
    // Predicated region
    $region2: #{tpu_custom_call.1} parent=1 // pred_check
      _
    $region3: #{tpu_custom_call.1} parent=1 // pred_check_branch
      %9 = sbr.rel (0) target = $region5
    $region4: #{tpu_custom_call.1} parent=1 // pred_region
      %s11 = ssub.s32 1024, 1024
      %12 = vsyncadd [#allocation3], %s11
      %s14 = sshll.u32 [#allocation2], 4
      %s15 = int_to_ptr.vmem [resolvable:$true] %s14
      %17 = dma.hbm_to_vmem [thread:$0]  %s0, 1024, %s15, [#allocation3]
    $region5: #{tpu_custom_call.1} parent=1 // pred_fallthru
      _
    // Predicated region
    $region6: #{tpu_custom_call.1} parent=1 // pred_check
      _
    $region7: #{tpu_custom_call.1} parent=1 // pred_check_branch
      %19 = sbr.rel (0) target = $region9
    $region8: #{tpu_custom_call.1} parent=1 // pred_region
      %20 = dma.done [#allocation3], 1024
    $region9: #{tpu_custom_call.1} parent=1 // pred_fallthru
      _
    %v21 = vld [vmem:[#allocation2] sm:$0xff]
    %v22 = vld [vmem:[#allocation2 + $0x8] sm:$0xff]
    %v23 = vld [vmem:[#allocation2 + $0x10] sm:$0xff]
    %v24 = vld [vmem:[#allocation2 + $0x18] sm:$0xff]
    %v25 = vld [vmem:[#allocation2 + $0x20] sm:$0xff]
    %v26 = vld [vmem:[#allocation2 + $0x28] sm:$0xff]
    %v27 = vld [vmem:[#allocation2 + $0x30] sm:$0xff]
    %v28 = vld [vmem:[#allocation2 + $0x38] sm:$0xff]
    %v29 = vadd.f32 %v21, 3.0
    %v30 = vadd.f32 %v22, 3.0
    %v31 = vadd.f32 %v23, 3.0
    %v32 = vadd.f32 %v24, 3.0
    %v33 = vadd.f32 %v25, 3.0
    %v34 = vadd.f32 %v26, 3.0
    %v35 = vadd.f32 %v27, 3.0
    %v36 = vadd.f32 %v28, 3.0
    %v37 = vmax.f32 %v29, 0.0
    %v38 = vmax.f32 %v30, 0.0
    %v39 = vmax.f32 %v31, 0.0
    %v40 = vmax.f32 %v32, 0.0
    %v41 = vmax.f32 %v33, 0.0
    %v42 = vmax.f32 %v34, 0.0
    %v43 = vmax.f32 %v35, 0.0
    %v44 = vmax.f32 %v36, 0.0
    %v45 = vmin.f32 %v37, 6.0
    %v46 = vmin.f32 %v38, 6.0
    %v47 = vmin.f32 %v39, 6.0
    %v48 = vmin.f32 %v40, 6.0
    %v49 = vmin.f32 %v41, 6.0
    %v50 = vmin.f32 %v42, 6.0
    %v51 = vmin.f32 %v43, 6.0
    %v52 = vmin.f32 %v44, 6.0
    %v53 = vmul.f32 %v21, %v45
    %v54 = vmul.f32 %v22, %v46
    %v55 = vmul.f32 %v23, %v47
    %v56 = vmul.f32 %v24, %v48
    %v57 = vmul.f32 %v25, %v49
    %v58 = vmul.f32 %v26, %v50
    %v59 = vmul.f32 %v27, %v51
    %v60 = vmul.f32 %v28, %v52
    %v61 = vmul.f32 %v53, 0.16666667
    %v62 = vmul.f32 %v54, 0.16666667
    %v63 = vmul.f32 %v55, 0.16666667
    %v64 = vmul.f32 %v56, 0.16666667
    %v65 = vmul.f32 %v57, 0.16666667
    %v66 = vmul.f32 %v58, 0.16666667
    %v67 = vmul.f32 %v59, 0.16666667
    %v68 = vmul.f32 %v60, 0.16666667
    %69 = vst [vmem:[#allocation5] sm:$0xff] %v61
    %70 = vst [vmem:[#allocation5 + $0x8] sm:$0xff] %v62
    %71 = vst [vmem:[#allocation5 + $0x10] sm:$0xff] %v63
    %72 = vst [vmem:[#allocation5 + $0x18] sm:$0xff] %v64
    %73 = vst [vmem:[#allocation5 + $0x20] sm:$0xff] %v65
    %74 = vst [vmem:[#allocation5 + $0x28] sm:$0xff] %v66
    %75 = vst [vmem:[#allocation5 + $0x30] sm:$0xff] %v67
    %76 = vst [vmem:[#allocation5 + $0x38] sm:$0xff] %v68
    // Predicated region
    $region10: #{tpu_custom_call.1} parent=1 // pred_check
      _
    $region11: #{tpu_custom_call.1} parent=1 // pred_check_branch
      %78 = sbr.rel (0) target = $region13
    $region12: #{tpu_custom_call.1} parent=1 // pred_region
      %s80 = ssub.s32 1024, 1024
      %81 = vsyncadd [#allocation4], %s80
      %s83 = sshll.u32 [#allocation5], 4
      %s84 = int_to_ptr.vmem [resolvable:$true] %s83
      %86 = dma.vmem_to_hbm [thread:$0]  %s84, 1024, %s1, [#allocation4]
    $region13: #{tpu_custom_call.1} parent=1 // pred_fallthru
      _
    // Predicated region
    $region14: #{tpu_custom_call.1} parent=1 // pred_check
      _
    $region15: #{tpu_custom_call.1} parent=1 // pred_check_branch
      %88 = sbr.rel (0) target = $region17
    $region16: #{tpu_custom_call.1} parent=1 // pred_region
      %89 = dma.done [#allocation4], 1024
    $region17: #{tpu_custom_call.1} parent=1 // pred_fallthru
      _
    %90 = vsyncpa [#allocation3], 1
    %91 = vsyncpa [#allocation4], 1

</llo_original>
